<compile_context>
chip_gen: v7x
topology: tpu7x:2x2x1
jax: 0.10.0
libtpu: 0.0.40
codegen_flags: <defaults>
</compile_context>

<pallas_src>
import functools

import jax
import jax.numpy as jnp
from jax import lax
from jax.experimental import pallas as pl
from jax.experimental.pallas import tpu as pltpu


def _nconv_kernel(x_ref, at_ref, o_ref, *, unroll, precision):
    """One grid step: a block of Bb flattened-(n, c) samples.

    x_ref:  [Bb, V, L]   streamed input block
    at_ref: [W, V]       A^T, resident in VMEM across all grid steps
    o_ref:  [Bb, W, L]   streamed output block
    """
    nb = x_ref.shape[0]                 # static block batch size
    num_chunks = nb // unroll           # exact: wrapper enforces divisibility

    def body(g, carry):
        base = g * unroll
        for u in range(unroll):         # static unroll inside the rolled loop
            b = base + u
            # out[b] = A^T @ x[b]; L stays on the lane axis, f32 MXU accumulate.
            # A^T is read from VMEM here (not hoisted across the whole block).
            o_ref[b] = jnp.dot(
                at_ref[...], x_ref[b],
                preferred_element_type=jnp.float32,
                precision=precision,
            ).astype(o_ref.dtype)
        return carry

    lax.fori_loop(0, num_chunks, body, 0)


def nconv(x, A, *, block_b=None, vmem_target_bytes=8 << 20, precision=None):
    """Pallas TPU implementation of  einsum('ncvl,vw->ncwl', x, A).

    Args:
      x: [N, C, V, L] input.
      A: [V, W] adjacency / diffusion matrix.
      block_b: samples (flattened n*c) per grid step; auto-sized if None.
      vmem_target_bytes: target size of each streamed input block.
      precision: matmul precision (pass lax.Precision.HIGHEST for tighter
        agreement with a HIGHEST-precision reference); None = TPU default.
    Returns:
      [N, C, W, L] with the same dtype as x.
    """
    N, C, V, L = x.shape
    Va, W = A.shape
    assert Va == V, f"A first dim {Va} must match x's node dim {V}"

    B = N * C
    xf = x.reshape(B, V, L)                 # contiguous reshape: free
    at = jnp.transpose(A)                   # [W, V]; tiny, resident in VMEM

    itemsize = jnp.dtype(x.dtype).itemsize
    per_in = V * L * itemsize               # one sample's input bytes
    per_out = W * L * itemsize              # one sample's output bytes
    at_bytes = V * W * jnp.dtype(A.dtype).itemsize

    # Generation-aware VMEM budget (v5e/v6e: 128 MiB physical, v7x: 64 MiB).
    try:
        vmem_cap = int(pltpu.get_tpu_info().vmem_capacity_bytes)
    except Exception:  # e.g. no TPU visible at trace time
        vmem_cap = 64 << 20
    vmem_limit = int(max(32 << 20, min((3 * vmem_cap) // 4, 64 << 20)))
    # Streamed working set = double-buffered (input + output) blocks; keep
    # ~20% slack plus room for the (double-buffered) resident A^T.
    stream_budget = max(int(0.8 * vmem_limit) - 2 * at_bytes,
                        2 * (per_in + per_out))

    if block_b is None:
        # Multi-MiB input DMAs (amortize ~0.35 us/step grid overhead)...
        block_b = max(1, vmem_target_bytes // per_in)
        # ...that still fit the double-buffered in+out working set...
        block_b = min(block_b, max(1, stream_budget // (2 * (per_in + per_out))))
        block_b = min(block_b, B)
        # ...while keeping >= 8 grid steps when B allows, so the 'parallel'
        # batch axis pipelines and splits across v7x's 2 TensorCores.
        if B >= 8:
            block_b = min(block_b, max(1, B // 8))
        if block_b >= 8:
            block_b -= block_b % 8          # align to the 8-way unroll factor

    block_b = max(1, min(int(block_b), B))
    # Largest unroll factor <= 8 that divides block_b.
    unroll = 8
    while block_b % unroll:
        unroll -= 1
    assert block_b % unroll == 0

    num_blocks = pl.cdiv(B, block_b)        # partial edge block is masked by Pallas

    kernel = functools.partial(_nconv_kernel, unroll=unroll, precision=precision)

    out = pl.pallas_call(
        kernel,
        out_shape=jax.ShapeDtypeStruct((B, W, L), x.dtype),
        grid_spec=pltpu.PrefetchScalarGridSpec(
            num_scalar_prefetch=0,
            grid=(num_blocks,),
            in_specs=[
                # Last two dims equal the full array extents -> (8,128) rule OK.
                pl.BlockSpec((block_b, V, L), lambda b: (b, 0, 0)),
                pl.BlockSpec((W, V), lambda b: (0, 0)),   # constant -> one DMA
            ],
            out_specs=pl.BlockSpec((block_b, W, L), lambda b: (b, 0, 0)),
        ),
        compiler_params=pltpu.CompilerParams(
            dimension_semantics=("parallel",),
            vmem_limit_bytes=vmem_limit,
        ),
        cost_estimate=pl.CostEstimate(
            flops=2 * B * W * V * L,
            bytes_accessed=itemsize * B * L * (V + W) + at_bytes,
            transcendentals=0,
        ),
    )(xf, at)

    return out.reshape(N, C, W, L)


def _reference(x, A):
    return jnp.einsum("ncvl,vw->ncwl", x, A, precision=lax.Precision.HIGHEST)


if __name__ == "__main__":
    key = jax.random.PRNGKey(0)
    k1, k2, k3, k4 = jax.random.split(key, 4)

    # Case 1: square A, lane-dense L, auto block sizing.
    N, C, V, L = 2, 4, 16, 128
    x = jax.random.normal(k1, (N, C, V, L), dtype=jnp.float32)
    A = jax.random.normal(k2, (V, V), dtype=jnp.float32)
    out = jax.block_until_ready(nconv(x, A))
    ref = _reference(x, A)
    assert out.shape == ref.shape
    assert jnp.allclose(out, ref, atol=1e-3, rtol=1e-3), (
        float(jnp.max(jnp.abs(out - ref))))

    # Case 2: non-square A (V -> W), B=15 not divisible by the explicit block
    # size -> exercises the unroll=8 path and the masked partial edge block.
    N2, C2, V2, L2, W2 = 3, 5, 16, 128, 32
    x2 = jax.random.normal(k3, (N2, C2, V2, L2), dtype=jnp.float32)
    A2 = jax.random.normal(k4, (V2, W2), dtype=jnp.float32)
    out2 = jax.block_until_ready(nconv(x2, A2, block_b=8))
    ref2 = _reference(x2, A2)
    assert out2.shape == ref2.shape
    assert jnp.allclose(out2, ref2, atol=1e-3, rtol=1e-3), (
        float(jnp.max(jnp.abs(out2 - ref2))))

    print("KERNEL_OK")
</pallas_src>

<mosaic_0001>
module attributes {stable_mosaic.version = 11 : i64} {
  func.func @_nconv_kernel(%arg0: i32, %arg1: memref<1x16x128xf32, #tpu.memory_space<vmem>>, %arg2: memref<16x16xf32, #tpu.memory_space<vmem>>, %arg3: memref<1x16x128xf32, #tpu.memory_space<vmem>>) attributes {dimension_semantics = [#tpu.dimension_semantics<parallel>], iteration_bounds = array<i64: 8>, scalar_prefetch = 0 : i64, scratch_operands = 0 : i64, tpu.core_type = #tpu.core_type<tc>, window_params = [{transform_indices = @transform_0, window_bounds = array<i64: 1, 16, 128>}, {pipeline_mode = #tpu.pipeline_mode<synchronous>, transform_indices = @transform_1, window_bounds = array<i64: 16, 16>}, {transform_indices = @transform_2, window_bounds = array<i64: 1, 16, 128>}]} {
    %c0_i32 = arith.constant 0 : i32
    %c1_i32 = arith.constant 1 : i32
    %0 = arith.muli %c0_i32, %c1_i32 : i32
    %c0_i32_0 = arith.constant 0 : i32
    %1 = arith.addi %0, %c0_i32_0 : i32
    %c0 = arith.constant 0 : index
    %c0_1 = arith.constant 0 : index
    %2 = vector.load %arg2[%c0, %c0_1] : memref<16x16xf32, #tpu.memory_space<vmem>>, vector<16x16xf32>
    %3 = arith.index_cast %1 : i32 to index
    %c0_2 = arith.constant 0 : index
    %c0_3 = arith.constant 0 : index
    %4 = vector.load %arg1[%3, %c0_2, %c0_3] : memref<1x16x128xf32, #tpu.memory_space<vmem>>, vector<1x16x128xf32>
    %5 = vector.shape_cast %4 : vector<1x16x128xf32> to vector<16x128xf32>
    %cst = arith.constant dense<0.000000e+00> : vector<16x128xf32>
    %6 = tpu.matmul %2, %5, %cst {dimension_numbers = #tpu.dot_dimension_numbers<[1], [0], [0], [1], [0, 0, 1, 1], [], []>} : vector<16x16xf32>, vector<16x128xf32>, vector<16x128xf32> -> vector<16x128xf32>
    %7 = arith.index_cast %1 : i32 to index
    %c0_4 = arith.constant 0 : index
    %c0_5 = arith.constant 0 : index
    %8 = vector.load %arg3[%7, %c0_4, %c0_5] : memref<1x16x128xf32, #tpu.memory_space<vmem>>, vector<1x16x128xf32>
    %9 = vector.shape_cast %8 : vector<1x16x128xf32> to vector<16x128xf32>
    %10 = vector.shape_cast %6 : vector<16x128xf32> to vector<1x16x128xf32>
    tpu.vector_store %arg3[%7, %c0_4, %c0_5], %10 {strides = array<i32>} : memref<1x16x128xf32, #tpu.memory_space<vmem>>, vector<1x16x128xf32>,
    %c1_i32_6 = arith.constant 1 : i32
    return
  }
  func.func @transform_0(%arg0: i32) -> (i32, i32, i32) {
    %c0_i32 = arith.constant 0 : i32
    %c0_i32_0 = arith.constant 0 : i32
    %c0_i32_1 = arith.constant 0 : i32
    return %arg0, %c0_i32, %c0_i32_0 : i32, i32, i32
  }
  func.func @transform_1(%arg0: i32) -> (i32, i32) {
    %c0_i32 = arith.constant 0 : i32
    %c0_i32_0 = arith.constant 0 : i32
    %c0_i32_1 = arith.constant 0 : i32
    return %c0_i32, %c0_i32_0 : i32, i32
  }
  func.func @transform_2(%arg0: i32) -> (i32, i32, i32) {
    %c0_i32 = arith.constant 0 : i32
    %c0_i32_0 = arith.constant 0 : i32
    %c0_i32_1 = arith.constant 0 : i32
    return %arg0, %c0_i32, %c0_i32_0 : i32, i32, i32
  }
}

</mosaic_0001>

<llo_original>
// kernel: tpu_custom_call.1
$region0: #{tpu_custom_call.1}
  #allocation0 [shape = 'u32[]', space=smem, size = 0x4, offset = 0x4, fixed_abs, tag = 'smem constant byte address 0x4 - core index']
  #allocation1 [shape = 'u32[144,128]{1,0:T(1,128)}', space=vmem, size = 0x12000, scoped, tag = 'internal scratch']
  %s0 = inlined_call_operand.hbm [shape: f32[8,16,128], index: 0, kind: input, shape index: {}]
  %s1 = inlined_call_operand.hbm [shape: f32[16,16], index: 1, kind: input, shape index: {}]
  %s2 = inlined_call_operand.hbm [shape: f32[8,16,128], index: 2, kind: output, shape index: {}]
  %s3 = sld [smem:[#allocation0]]
  $region49: #{tpu_custom_call.1} parent=0
    _
  %s5 = ssub.s32 1, %s3
  %s6 = scalar_select 0, %s5, %s3
  $region1: #{tpu_custom_call.1} parent=0
    #allocation2 [shape = 'u8[16384]{0}', space=vmem, size = 0x4000, scoped, tag = 'input window, operand 0']
    #allocation3 [shape = 's32[2]{0}', space=sflag, size = 0x8, scoped, tag = 'scoped memory for tpu_custom_call.1']
    #allocation4 [shape = 's32[2]{0}', space=sflag, size = 0x8, scoped, tag = 'scoped memory for tpu_custom_call.1']
    #allocation5 [shape = 'u8[8192]{0}', space=vmem, size = 0x2000, scoped, tag = 'input window, operand 1, single buffered']
    #allocation6 [shape = 's32[1]{0}', space=sflag, size = 0x4, scoped, tag = 'scoped memory for tpu_custom_call.1']
    #allocation7 [shape = 'u8[16384]{0}', space=vmem, size = 0x4000, scoped, tag = 'output window, operand 0']
    %7 = vsyncpa [#allocation3], 0
    %s8 = scalar_lea.sflag [#allocation3], 1
    %9 = vsyncpa %s8, 0
    %10 = vsyncpa [#allocation6], 0
    %11 = vsyncpa [#allocation4], 0
    %s12 = scalar_lea.sflag [#allocation4], 1
    %13 = vsyncpa %s12, 0
    loop: start=0, step=1, limit=10
    $region2: #{tpu_custom_call.1} parent=1 // loop_pre_header
      _
    $region3: #{tpu_custom_call.1} parent=1 // loop_header
      %s15 = sphi 0, %s19
      %p16 = scmp.ge.s32.totalorder %s15, 10
      %s25 = sphi 0, %s27
      %s28 = sphi 0, %s25
      %s29 = sphi 0, %s28
      %s45 = sphi 0, %s29
      %s49 = sphi 0, %s49
      %s51 = sphi 0, %s49
      %s52 = sphi 0, %s51
      %s66 = sphi 0, %s52
      %s72 = sphi 0, %s74
      %s75 = sphi 0, %s72
      %s76 = sphi 0, %s75
      %s92 = sphi 0, %s76
    $region4: #{tpu_custom_call.1} parent=1 // loop_header_branch
      %18 = sbr.rel (%p16) target = $region8
    $region5: #{tpu_custom_call.1} parent=1 // loop_body
      %s20 = ssub.s32 %s15, 1
      %s21 = ssub.s32 %s15, 2
      %s22 = sadd.s32 %s15, 1
      %s23 = ssub.s32 %s15, %s22
      %p24 = scmp.eq.s32.totalorder %s23, 0
      %s26 = sadd.s32 %s25, 1
      %s27 = scalar_select %p24, %s25, %s26
      %p30 = pneg %p24
      %p31 = scmp.eq.s32.totalorder %s15, 7
      %p32 = por %p30, %p31
      %p33 = scmp.ne.s32.totalorder %s25, %s28
      %p34 = scmp.eq.s32.totalorder %s15, 0
      %p35 = por %p33, %p34
      %p36 = scmp.ne.s32.totalorder %s25, %s28
      %p37 = scmp.eq.s32.totalorder %s20, 7
      %p38 = por %p36, %p37
      %p39 = scmp.ne.s32.totalorder %s28, %s29
      %p40 = scmp.eq.s32.totalorder %s20, 0
      %p41 = por %p39, %p40
      %p42 = scmp.ne.s32.totalorder %s28, %s29
      %p43 = scmp.eq.s32.totalorder %s21, 7
      %p44 = por %p42, %p43
      %p46 = scmp.ne.s32.totalorder %s29, %s45
      %p47 = scmp.eq.s32.totalorder %s21, 0
      %p48 = por %p46, %p47
      %s50 = sadd.s32 %s49, 1
      %p53 = scmp.eq.s32.totalorder %s15, 7
      %p54 = scmp.ne.s32.totalorder %s49, %s51
      %p55 = scmp.eq.s32.totalorder %s15, 0
      %p56 = por %p54, %p55
      %p57 = scmp.ne.s32.totalorder %s49, %s51
      %p58 = scmp.eq.s32.totalorder %s20, 7
      %p59 = por %p57, %p58
      %p60 = scmp.ne.s32.totalorder %s51, %s52
      %p61 = scmp.eq.s32.totalorder %s20, 0
      %p62 = por %p60, %p61
      %p63 = scmp.ne.s32.totalorder %s51, %s52
      %p64 = scmp.eq.s32.totalorder %s21, 7
      %p65 = por %p63, %p64
      %p67 = scmp.ne.s32.totalorder %s52, %s66
      %p68 = scmp.eq.s32.totalorder %s21, 0
      %p69 = por %p67, %p68
      %s70 = ssub.s32 %s15, %s22
      %p71 = scmp.eq.s32.totalorder %s70, 0
      %s73 = sadd.s32 %s72, 1
      %s74 = scalar_select %p71, %s72, %s73
      %p77 = pneg %p71
      %p78 = scmp.eq.s32.totalorder %s15, 7
      %p79 = por %p77, %p78
      %p80 = scmp.ne.s32.totalorder %s72, %s75
      %p81 = scmp.eq.s32.totalorder %s15, 0
      %p82 = por %p80, %p81
      %p83 = scmp.ne.s32.totalorder %s72, %s75
      %p84 = scmp.eq.s32.totalorder %s20, 7
      %p85 = por %p83, %p84
      %p86 = scmp.ne.s32.totalorder %s75, %s76
      %p87 = scmp.eq.s32.totalorder %s20, 0
      %p88 = por %p86, %p87
      %p89 = scmp.ne.s32.totalorder %s75, %s76
      %p90 = scmp.eq.s32.totalorder %s21, 7
      %p91 = por %p89, %p90
      %p93 = scmp.ne.s32.totalorder %s76, %s92
      %p94 = scmp.eq.s32.totalorder %s21, 0
      %p95 = por %p93, %p94
      %p96 = scmp.le.s32.totalorder 1, %s15
      %p97 = scmp.lt.s32.totalorder %s15, 9
      %p98 = pnand %p96, %p97
      %p99 = pneg %p98
      // Predicated region
      $region9: #{tpu_custom_call.1} parent=5 // pred_check
        _
      $region10: #{tpu_custom_call.1} parent=5 // pred_check_branch
        %101 = sbr.rel (%p98) target = $region12
      $region11: #{tpu_custom_call.1} parent=5 // pred_region
        %s102 = ssub.s32 %s15, 1
        // Predicated region
        $region13: #{tpu_custom_call.1} parent=11 // pred_check
          %p103 = pneg %p62
        $region14: #{tpu_custom_call.1} parent=11 // pred_check_branch
          %105 = sbr.rel (%p103) target = $region16
        $region15: #{tpu_custom_call.1} parent=11 // pred_region
          %s107 = ssub.s32 256, 256
          %108 = vsyncadd [#allocation6], %s107
          %s109 = sshll.u32 [#allocation5], 4
          %s110 = int_to_ptr.vmem [resolvable:$true] %s109
          %115 = dma.hbm_to_vmem [thread:$0]  %s1, 256, %s110, [#allocation6], 128, 128, 8
        $region16: #{tpu_custom_call.1} parent=11 // pred_fallthru
          _
      $region12: #{tpu_custom_call.1} parent=5 // pred_fallthru
        _
      %p116 = scmp.lt.s32.totalorder %s15, 8
      // Predicated region
      $region17: #{tpu_custom_call.1} parent=5 // pred_check
        %p117 = pneg %p116
      $region18: #{tpu_custom_call.1} parent=5 // pred_check_branch
        %119 = sbr.rel (%p117) target = $region20
      $region19: #{tpu_custom_call.1} parent=5 // pred_region
        // Predicated region
        $region21: #{tpu_custom_call.1} parent=19 // pred_check
          %p120 = pneg %p35
        $region22: #{tpu_custom_call.1} parent=19 // pred_check_branch
          %122 = sbr.rel (%p120) target = $region24
        $region23: #{tpu_custom_call.1} parent=19 // pred_region
          %s123 = sand.u32 %s25, 1
          %s124 = scalar_lea.sflag [#allocation3], %s123
          %s125 = sand.u32 %s25, 1
          %s126 = smul.addr %s125, 16
          %s127 = scalar_lea.vmem [#allocation2], %s126
          %s129 = ssub.s32 256, 256
          %130 = vsyncadd %s124, %s129
          %s131 = smul.addr %s15, 2
          %s132 = smul.addr %s131, 128
          %s133 = scalar_lea.hbm %s0, %s132
          %s134 = sshll.u32 %s127, 4
          %s135 = int_to_ptr.vmem [resolvable:$true] %s134
          %140 = dma.hbm_to_vmem [thread:$0]  %s133, 256, %s135, %s124, 128, 128, 8
        $region24: #{tpu_custom_call.1} parent=19 // pred_fallthru
          _
      $region20: #{tpu_custom_call.1} parent=5 // pred_fallthru
        _
      %p141 = scmp.le.s32.totalorder 1, %s15
      %p142 = scmp.lt.s32.totalorder %s15, 9
      %p143 = pnand %p141, %p142
      %p144 = pneg %p143
      // Predicated region
      $region25: #{tpu_custom_call.1} parent=5 // pred_check
        _
      $region26: #{tpu_custom_call.1} parent=5 // pred_check_branch
        %146 = sbr.rel (%p143) target = $region28
      $region27: #{tpu_custom_call.1} parent=5 // pred_region
        %s147 = ssub.s32 %s15, 1
        %s148 = sand.u32 %s28, 1
        %s149 = scalar_lea.sflag [#allocation3], %s148
        %s150 = sand.u32 %s28, 1
        %s151 = smul.addr %s150, 16
        %s152 = scalar_lea.vmem [#allocation2], %s151
        // Predicated region
        $region29: #{tpu_custom_call.1} parent=27 // pred_check
          %p153 = pneg %p41
        $region30: #{tpu_custom_call.1} parent=27 // pred_check_branch
          %155 = sbr.rel (%p153) target = $region32
        $region31: #{tpu_custom_call.1} parent=27 // pred_region
          %156 = dma.done %s149, 256
        $region32: #{tpu_custom_call.1} parent=27 // pred_fallthru
          _
        // Predicated region
        $region33: #{tpu_custom_call.1} parent=27 // pred_check
          %p157 = pneg %p62
        $region34: #{tpu_custom_call.1} parent=27 // pred_check_branch
          %159 = sbr.rel (%p157) target = $region36
        $region35: #{tpu_custom_call.1} parent=27 // pred_region
          %160 = dma.done [#allocation6], 256
        $region36: #{tpu_custom_call.1} parent=27 // pred_fallthru
          _
        %s161 = sand.u32 %s28, 1
        %s162 = scalar_lea.sflag [#allocation3], %s161
        %s163 = sand.u32 %s28, 1
        %s164 = smul.addr %s163, 16
        %s165 = scalar_lea.vmem [#allocation2], %s164
        %p166 = pneg %p41
        %p167 = pneg %p38
        %p168 = pneg %p62
        %p169 = pneg %p59
        %p170 = pneg %p88
        %p171 = pneg %p85
        %s172 = sand.u32 %s75, 1
        %s173 = scalar_lea.sflag [#allocation4], %s172
        %s174 = sand.u32 %s75, 1
        %s175 = smul.addr %s174, 16
        %s176 = scalar_lea.vmem [#allocation7], %s175
        %v177 = vld [vmem:[#allocation5] sm:$0xff]
        %v178 = vld [vmem:[#allocation5 + $0x8] sm:$0xff]
        %v179 = vld [vmem:[%s152] sm:$0xff]
        %v180 = vld [vmem:[%s152 + $0x8] sm:$0xff]
        %vm181 = vcmask 130048
        %v183 = vsel %vm181, %v177, 0
        %v186 = vsel %vm181, %v178, 0
        %188 = vmatprep.subr.mxu0 0.0
        %189 = vmatpush1.msra.mxu0 %v179
        %190 = vmatprep.subr.mxu0 0.0
        %191 = vmatpush1.msra.mxu0 %v180
        %192 = vmatprep.subr.mxu0 0.0
        %193 = vmatpush1.msra.mxu0 0.0
        %194 = vmatprep.subr.mxu0 0.0
        %195 = vmatpush1.msra.mxu0 0.0
        %196 = vmatprep.subr.mxu0 0.0
        %197 = vmatpush1.msra.mxu0 0.0
        %198 = vmatprep.subr.mxu0 0.0
        %199 = vmatpush1.msra.mxu0 0.0
        %200 = vmatprep.subr.mxu0 0.0
        %201 = vmatpush1.msra.mxu0 0.0
        %202 = vmatprep.subr.mxu0 0.0
        %203 = vmatpush1.msra.mxu0 0.0
        %204 = vmatprep.subr.mxu0 0.0
        %205 = vmatpush1.msra.mxu0 0.0
        %206 = vmatprep.subr.mxu0 0.0
        %207 = vmatpush1.msra.mxu0 0.0
        %208 = vmatprep.subr.mxu0 0.0
        %209 = vmatpush1.msra.mxu0 0.0
        %210 = vmatprep.subr.mxu0 0.0
        %211 = vmatpush1.msra.mxu0 0.0
        %212 = vmatprep.subr.mxu0 0.0
        %213 = vmatpush1.msra.mxu0 0.0
        %214 = vmatprep.subr.mxu0 0.0
        %215 = vmatpush1.msra.mxu0 0.0
        %216 = vmatprep.subr.mxu0 0.0
        %217 = vmatpush1.msra.mxu0 0.0
        %218 = vmatprep.subr.mxu0 0.0
        %219 = vmatpush1.msra.mxu0 0.0
        %220 = vmatprep.subr.mxu0 0.0
        %221 = vmatpush1.msra.mxu0 0.0
        %222 = vmatprep.subr.mxu0 0.0
        %223 = vmatpush1.msra.mxu0 0.0
        %224 = vmatprep.subr.mxu0 0.0
        %225 = vmatpush1.msra.mxu0 0.0
        %226 = vmatprep.subr.mxu0 0.0
        %227 = vmatpush1.msra.mxu0 0.0
        %228 = vmatprep.subr.mxu0 0.0
        %229 = vmatpush1.msra.mxu0 0.0
        %230 = vmatprep.subr.mxu0 0.0
        %231 = vmatpush1.msra.mxu0 0.0
        %232 = vmatprep.subr.mxu0 0.0
        %233 = vmatpush1.msra.mxu0 0.0
        %234 = vmatprep.subr.mxu0 0.0
        %235 = vmatpush1.msra.mxu0 0.0
        %236 = vmatprep.subr.mxu0 0.0
        %237 = vmatpush1.msra.mxu0 0.0
        %238 = vmatprep.subr.mxu0 0.0
        %239 = vmatpush1.msra.mxu0 0.0
        %240 = vmatprep.subr.mxu0 0.0
        %241 = vmatpush1.msra.mxu0 0.0
        %242 = vmatprep.subr.mxu0 0.0
        %243 = vmatpush1.msra.mxu0 0.0
        %244 = vmatprep.subr.mxu0 0.0
        %245 = vmatpush1.msra.mxu0 0.0
        %246 = vmatprep.subr.mxu0 0.0
        %247 = vmatpush1.msra.mxu0 0.0
        %248 = vmatprep.subr.mxu0 0.0
        %249 = vmatpush1.msra.mxu0 0.0
        %250 = vmatprep.subr.mxu0 0.0
        %251 = vmatpush1.msra.mxu0 0.0
        %252 = vmatprep.mubr.f32.mxu0 0.0
        %253 = vmatmul.mubr.f32.gmra.mrb[0].mxu0 %v183
        %v254 = vpop.f32.mrb[0].mxu0
        %v255 = vadd.f32 0.0, %v254
        %v256 = vpop.f32.mrb[0].mxu0
        %257 = vmatprep.mubr.f32.mxu0 0.0
        %258 = vmatmul.mubr.f32.gmra.mrb[0].mxu0 %v186
        %v259 = vpop.f32.mrb[0].mxu0
        %v260 = vadd.f32 0.0, %v259
        %v261 = vpop.f32.mrb[0].mxu0
        %262 = vdwg.mxu0
        %263 = vst [vmem:[%s176] sm:$0xff] %v255
        %264 = vst [vmem:[%s176 + $0x8] sm:$0xff] %v260
        %s265 = sand.u32 %s75, 1
        %s266 = scalar_lea.sflag [#allocation4], %s265
        %s267 = sand.u32 %s75, 1
        %s268 = smul.addr %s267, 16
        %s269 = scalar_lea.vmem [#allocation7], %s268
        // Predicated region
        $region37: #{tpu_custom_call.1} parent=27 // pred_check
          %p270 = pneg %p85
        $region38: #{tpu_custom_call.1} parent=27 // pred_check_branch
          %272 = sbr.rel (%p270) target = $region40
        $region39: #{tpu_custom_call.1} parent=27 // pred_region
          %s274 = ssub.s32 256, 256
          %275 = vsyncadd %s266, %s274
          %s276 = smul.addr %s20, 2
          %s277 = smul.addr %s276, 128
          %s278 = scalar_lea.hbm %s2, %s277
          %s279 = sshll.u32 %s269, 4
          %s280 = int_to_ptr.vmem [resolvable:$true] %s279
          %285 = dma.vmem_to_hbm [thread:$0]  %s280, 256, %s278, %s266, 128, 128, 8
        $region40: #{tpu_custom_call.1} parent=27 // pred_fallthru
          _
      $region28: #{tpu_custom_call.1} parent=5 // pred_fallthru
        _
      %p286 = scmp.le.s32.totalorder 2, %s15
      // Predicated region
      $region41: #{tpu_custom_call.1} parent=5 // pred_check
        %p287 = pneg %p286
      $region42: #{tpu_custom_call.1} parent=5 // pred_check_branch
        %289 = sbr.rel (%p287) target = $region44
      $region43: #{tpu_custom_call.1} parent=5 // pred_region
        %s290 = ssub.s32 %s15, 2
        // Predicated region
        $region45: #{tpu_custom_call.1} parent=43 // pred_check
          %p291 = pneg %p91
        $region46: #{tpu_custom_call.1} parent=43 // pred_check_branch
          %293 = sbr.rel (%p291) target = $region48
        $region47: #{tpu_custom_call.1} parent=43 // pred_region
          %s294 = sand.u32 %s76, 1
          %s295 = scalar_lea.sflag [#allocation4], %s294
          %s296 = sand.u32 %s76, 1
          %s297 = smul.addr %s296, 16
          %s298 = scalar_lea.vmem [#allocation7], %s297
          %299 = dma.done %s295, 256
        $region48: #{tpu_custom_call.1} parent=43 // pred_fallthru
          _
      $region44: #{tpu_custom_call.1} parent=5 // pred_fallthru
        _
    $region6: #{tpu_custom_call.1} parent=1 // loop_footer
      %s19 = sadd.s32 1, %s15
    $region7: #{tpu_custom_call.1} parent=1 // loop_footer_branch
      %14 = sbr.rel target = $region3
    $region8: #{tpu_custom_call.1} parent=1 // loop_exit
      _
    %300 = vsyncpa [#allocation3], 1
    %s301 = scalar_lea.sflag [#allocation3], 1
    %302 = vsyncpa %s301, 1
    %303 = vsyncpa [#allocation6], 1
    %304 = vsyncpa [#allocation4], 1
    %s305 = scalar_lea.sflag [#allocation4], 1
    %306 = vsyncpa %s305, 1

</llo_original>
